<compile_context>
chip_gen: v5e
topology: v5e:2x2
jax: 0.10.0
libtpu: 0.0.40
codegen_flags: <defaults>
</compile_context>

<pallas_src>
import math

import jax
import jax.numpy as jnp
from jax.experimental import pallas as pl
from jax.experimental.pallas import tpu as pltpu


# --------------------------------------------------------------------------
# Per-chip configuration (v5e/v6e: 128 MiB VMEM, 1 TC; v7x: 64 MiB, 2 TCs).
# --------------------------------------------------------------------------
def _chip_config():
    try:
        vmem_cap = int(pltpu.get_tpu_info().vmem_capacity_bytes)
    except Exception:           # conservative fallback if the query is absent
        vmem_cap = 64 * 1024 * 1024
    if vmem_cap >= 100 * 1024 * 1024:          # v5e / v6e: 128 MiB physical
        return {"vmem": 96 * 1024 * 1024, "pref": 512, "min_steps": 1}
    # v7x: 64 MiB physical, 2 TensorCores -> smaller budget and at least two
    # M-grid steps so the "parallel" axis can be split across both cores.
    return {"vmem": 48 * 1024 * 1024, "pref": 256, "min_steps": 2}


def _cparams(cfg, sems):
    return pltpu.CompilerParams(dimension_semantics=sems,
                                vmem_limit_bytes=cfg["vmem"])


def _ceil128(v):
    return max(128, ((v + 127) // 128) * 128)


def _row_tile(n, pref=256, min_steps=1):
    """Largest tile <= pref that divides n and is a multiple of 8; when
    min_steps > 1 also try to give at least that many grid steps."""
    cap = min(pref, n)
    if min_steps > 1 and (n // min_steps) >= 8:
        cap = min(cap, n // min_steps)
    cap = max(8, (cap // 8) * 8)
    for t in range(cap, 7, -8):
        if n % t == 0:
            return t
    return n


def _full_spec(arr):
    """Whole-array block with a constant index_map (stays VMEM-resident)."""
    nd = arr.ndim
    # TODO(synk): single-buffer these resident weights via
    # pipeline_mode=pl.Buffered(1) once verified on this toolchain (saves a
    # few MiB of VMEM on v7x; weights already fit the explicit budget).
    return pl.BlockSpec(arr.shape, lambda *_: (0,) * nd)


# --------------------------------------------------------------------------
# Fused encoder MLP (3 Linear+ReLU) + GConv projection: support = h @ Wgc
# (support stored bf16 in HBM; it is re-read by the Lap@support kernel)
# --------------------------------------------------------------------------
def _enc_mlp_kernel(x_ref, w1_ref, b1_ref, w2_ref, b2_ref, w3_ref, b3_ref,
                    wgc_ref, sup_ref):
    h = jnp.dot(x_ref[...].astype(jnp.bfloat16), w1_ref[...],
                preferred_element_type=jnp.float32) + b1_ref[...]
    h = jnp.maximum(h, 0.0)
    h = jnp.dot(h.astype(jnp.bfloat16), w2_ref[...],
                preferred_element_type=jnp.float32) + b2_ref[...]
    h = jnp.maximum(h, 0.0)
    h = jnp.dot(h.astype(jnp.bfloat16), w3_ref[...],
                preferred_element_type=jnp.float32) + b3_ref[...]
    h = jnp.maximum(h, 0.0)
    sup_ref[...] = jnp.dot(h.astype(jnp.bfloat16), wgc_ref[...],
                           preferred_element_type=jnp.float32
                           ).astype(jnp.bfloat16)


# --------------------------------------------------------------------------
# K-tiled GConv aggregation + ReLU + mu / softplus(var) heads (P3 pattern)
#   acc += Lap_tile @ support_tile ; at last k: h=relu(acc+b), mu/var heads
# --------------------------------------------------------------------------
def _gconv_heads_kernel(lap_ref, sup_ref, bgc_ref, wmu_ref, bmu_ref,
                        wlv_ref, blv_ref, mu_ref, var_ref, acc_ref):
    k = pl.program_id(1)

    @pl.when(k == 0)
    def _():
        acc_ref[...] = jnp.zeros_like(acc_ref)

    acc_ref[...] += jnp.dot(lap_ref[...], sup_ref[...],
                            preferred_element_type=jnp.float32)

    @pl.when(k == pl.num_programs(1) - 1)
    def _():
        h = jnp.maximum(acc_ref[...] + bgc_ref[...], 0.0)
        hb = h.astype(jnp.bfloat16)
        mu_ref[...] = (jnp.dot(hb, wmu_ref[...],
                               preferred_element_type=jnp.float32)
                       + bmu_ref[...])
        lv = (jnp.dot(hb, wlv_ref[...],
                      preferred_element_type=jnp.float32) + blv_ref[...])
        var_ref[...] = jax.nn.softplus(lv)        # keep f32: feeds sqrt() later


def encode_view(x_pad, lap, p, cfg):
    n, dpad = x_pad.shape
    zpad = p["wgc"].shape[1]
    tm = _row_tile(n, cfg["pref"], cfg["min_steps"])
    grid = (n // tm,)

    support = pl.pallas_call(
        _enc_mlp_kernel,
        out_shape=jax.ShapeDtypeStruct((n, zpad), jnp.bfloat16),
        grid=grid,
        in_specs=[pl.BlockSpec((tm, dpad), lambda i: (i, 0)),
                  _full_spec(p["w1"]), _full_spec(p["b1"]),
                  _full_spec(p["w2"]), _full_spec(p["b2"]),
                  _full_spec(p["w3"]), _full_spec(p["b3"]),
                  _full_spec(p["wgc"])],
        out_specs=pl.BlockSpec((tm, zpad), lambda i: (i, 0)),
        compiler_params=_cparams(cfg, ("parallel",)),
    )(x_pad, p["w1"], p["b1"], p["w2"], p["b2"], p["w3"], p["b3"], p["wgc"])

    tk = _row_tile(n, 512)                       # contraction (Lap column) tile
    mu, var = pl.pallas_call(
        _gconv_heads_kernel,
        out_shape=(jax.ShapeDtypeStruct((n, zpad), jnp.float32),
                   jax.ShapeDtypeStruct((n, zpad), jnp.float32)),
        grid=(n // tm, n // tk),
        in_specs=[pl.BlockSpec((tm, tk), lambda i, k: (i, k)),    # bf16 Lap
                  pl.BlockSpec((tk, zpad), lambda i, k: (k, 0)),  # bf16 support
                  _full_spec(p["bgc"]),
                  _full_spec(p["wmu"]), _full_spec(p["bmu"]),
                  _full_spec(p["wlv"]), _full_spec(p["blv"])],
        out_specs=(pl.BlockSpec((tm, zpad), lambda i, k: (i, 0)),
                   pl.BlockSpec((tm, zpad), lambda i, k: (i, 0))),
        scratch_shapes=[pltpu.VMEM((tm, zpad), jnp.float32)],
        compiler_params=_cparams(cfg, ("parallel", "arbitrary")),
    )(lap, support, p["bgc"], p["wmu"], p["bmu"], p["wlv"], p["blv"])
    return mu, var


# --------------------------------------------------------------------------
# Fused decoder: 4 Linear layers (ReLU, ReLU, ReLU, identity)
# --------------------------------------------------------------------------
def _dec_kernel(z_ref, w1_ref, b1_ref, w2_ref, b2_ref, w3_ref, b3_ref,
                w4_ref, b4_ref, xr_ref):
    h = jnp.dot(z_ref[...].astype(jnp.bfloat16), w1_ref[...],
                preferred_element_type=jnp.float32) + b1_ref[...]
    h = jnp.maximum(h, 0.0)
    h = jnp.dot(h.astype(jnp.bfloat16), w2_ref[...],
                preferred_element_type=jnp.float32) + b2_ref[...]
    h = jnp.maximum(h, 0.0)
    h = jnp.dot(h.astype(jnp.bfloat16), w3_ref[...],
                preferred_element_type=jnp.float32) + b3_ref[...]
    h = jnp.maximum(h, 0.0)
    xr_ref[...] = jnp.dot(h.astype(jnp.bfloat16), w4_ref[...],
                          preferred_element_type=jnp.float32) + b4_ref[...]


def decode_view(z_pad, p, cfg):
    n, zp = z_pad.shape
    dpad = p["w4"].shape[1]
    tm = _row_tile(n, cfg["pref"], cfg["min_steps"])
    return pl.pallas_call(
        _dec_kernel,
        out_shape=jax.ShapeDtypeStruct((n, dpad), jnp.float32),
        grid=(n // tm,),
        in_specs=[pl.BlockSpec((tm, zp), lambda i: (i, 0)),
                  _full_spec(p["w1"]), _full_spec(p["b1"]),
                  _full_spec(p["w2"]), _full_spec(p["b2"]),
                  _full_spec(p["w3"]), _full_spec(p["b3"]),
                  _full_spec(p["w4"]), _full_spec(p["b4"])],
        out_specs=pl.BlockSpec((tm, dpad), lambda i: (i, 0)),
        compiler_params=_cparams(cfg, ("parallel",)),
    )(z_pad, p["w1"], p["b1"], p["w2"], p["b2"], p["w3"], p["b3"],
      p["w4"], p["b4"])


# --------------------------------------------------------------------------
# Reparameterized sampling for all views + mean over views (N-tiled)
# --------------------------------------------------------------------------
def _sample_mean_kernel(mu_ref, var_ref, eps_ref, zs_ref, zm_ref):
    z = eps_ref[...] * jnp.sqrt(var_ref[...]) + mu_ref[...]
    zs_ref[...] = z
    zm_ref[...] = jnp.mean(z, axis=0)


def sample_and_mean(stack_mu, stack_var, eps, cfg):
    # TODO(synk): generate eps in-kernel with pltpu.prng_seed/stateful_normal
    # to drop the host RNG array (numerics would differ from the host stream).
    v, n, zpad = stack_mu.shape
    tm = _row_tile(n, cfg["pref"], cfg["min_steps"])
    spec3 = pl.BlockSpec((v, tm, zpad), lambda i: (0, i, 0))
    return pl.pallas_call(
        _sample_mean_kernel,
        out_shape=(jax.ShapeDtypeStruct((v, n, zpad), jnp.float32),
                   jax.ShapeDtypeStruct((n, zpad), jnp.float32)),
        grid=(n // tm,),
        in_specs=[spec3, spec3, spec3],
        out_specs=(spec3, pl.BlockSpec((tm, zpad), lambda i: (i, 0))),
        compiler_params=_cparams(cfg, ("parallel",)),
    )(stack_mu, stack_var, eps)


# --------------------------------------------------------------------------
# Graph construction (compute_Laplacian equivalent), tiled over (N, N)
# --------------------------------------------------------------------------
def _cosine_kernel(xi_ref, xj_ref, o_ref):
    # rows were normalized once outside; this is a pure MXU matmul
    # (xi @ xj.T without materializing a transpose: contract feature dims).
    o_ref[...] = jax.lax.dot_general(
        xi_ref[...], xj_ref[...], (((1,), (1,)), ((), ())),
        preferred_element_type=jnp.float32)


def _adj_deg_kernel(idx_ref, idxt_ref, adj_ref, deg_ref):
    # adj[i,j] = 1 iff (j in knn(i)) or (i in knn(j)); fuses binarize,
    # symmetrize and row-degree in one pass — no one_hot / adj.T in HBM.
    i = pl.program_id(0)
    j = pl.program_id(1)
    ti, tj = adj_ref.shape
    kn = idx_ref.shape[1]
    row_ids = i * ti + jax.lax.broadcasted_iota(jnp.int32, (ti, tj), 0)
    col_ids = j * tj + jax.lax.broadcasted_iota(jnp.int32, (ti, tj), 1)
    idx_i = idx_ref[...]          # (ti, k)  neighbors of this row tile
    idx_j = idxt_ref[...]         # (k, tj)  neighbors of this column tile
    a = jnp.zeros((ti, tj), jnp.float32)
    for kk in range(kn):          # k is small & static -> unrolled
        a = jnp.maximum(a, (idx_i[:, kk:kk + 1] == col_ids).astype(jnp.float32))
        a = jnp.maximum(a, (idx_j[kk:kk + 1, :] == row_ids).astype(jnp.float32))
    adj_ref[...] = a

    @pl.when(j == 0)
    def _():
        deg_ref[...] = jnp.zeros_like(deg_ref)

    deg_ref[...] += jnp.sum(a, axis=1, keepdims=True)


def _lap_norm_kernel(adj_ref, invr_ref, invc_ref, lap_ref):
    # rsqrt(deg) hoisted outside; Laplacian stored bf16 (it only feeds the
    # bf16 MXU Lap@support matmul).
    lap_ref[...] = (invr_ref[...] * adj_ref[...] * invc_ref[...]
                    ).astype(jnp.bfloat16)


def compute_laplacian(x_pad, n_neighbors, cfg):
    """kNN connectivity graph (cosine metric, include_self) -> (adj f32, Lap bf16)."""
    n, d = x_pad.shape
    t = _row_tile(n, 256, cfg["min_steps"])
    g = n // t

    # Hoisted row normalization (O(N*d), done once instead of per tile pair).
    xn = x_pad * jax.lax.rsqrt(
        jnp.sum(x_pad * x_pad, axis=1, keepdims=True) + 1e-12)

    sim = pl.pallas_call(
        _cosine_kernel,
        out_shape=jax.ShapeDtypeStruct((n, n), jnp.float32),
        grid=(g, g),
        in_specs=[pl.BlockSpec((t, d), lambda i, j: (i, 0)),
                  pl.BlockSpec((t, d), lambda i, j: (j, 0))],
        out_specs=pl.BlockSpec((t, t), lambda i, j: (i, j)),
        compiler_params=_cparams(cfg, ("parallel", "parallel")),
    )(xn, xn)

    # TODO(synk): top-k neighbor selection (a sort) stays in plain JAX; there
    # is no clean Pallas sort/top_k on TPU.  Nearest == largest cosine sim.
    _, idx = jax.lax.top_k(sim, n_neighbors)
    idx = idx.astype(jnp.int32)
    idx_t = idx.T                                    # (k, n), tiny

    adj, deg = pl.pallas_call(
        _adj_deg_kernel,
        out_shape=(jax.ShapeDtypeStruct((n, n), jnp.float32),
                   jax.ShapeDtypeStruct((n, 1), jnp.float32)),
        grid=(g, g),
        in_specs=[pl.BlockSpec((t, n_neighbors), lambda i, j: (i, 0)),
                  pl.BlockSpec((n_neighbors, t), lambda i, j: (0, j))],
        out_specs=(pl.BlockSpec((t, t), lambda i, j: (i, j)),
                   pl.BlockSpec((t, 1), lambda i, j: (i, 0))),
        compiler_params=_cparams(cfg, ("parallel", "arbitrary")),
    )(idx, idx_t)

    # Hoisted D^{-1/2}; max(deg,1) guards against a dropped self-edge under
    # cosine ties (deg >= 1 always in the reference construction).
    inv = jax.lax.rsqrt(jnp.maximum(deg, 1.0))       # (n, 1)
    inv_col = inv.reshape(1, n)                      # lane-dense column factors

    lap = pl.pallas_call(
        _lap_norm_kernel,
        out_shape=jax.ShapeDtypeStruct((n, n), jnp.bfloat16),
        grid=(g, g),
        in_specs=[pl.BlockSpec((t, t), lambda i, j: (i, j)),
                  pl.BlockSpec((t, 1), lambda i, j: (i, 0)),
                  pl.BlockSpec((1, t), lambda i, j: (0, j))],
        out_specs=pl.BlockSpec((t, t), lambda i, j: (i, j)),
        compiler_params=_cparams(cfg, ("parallel", "parallel")),
    )(adj, inv, inv_col)
    return adj, lap


# --------------------------------------------------------------------------
# Parameter init (mirrors PyTorch defaults; zero-padded to lane-dense shapes)
# --------------------------------------------------------------------------
def init_linear(key, fan_in, fan_out):
    kw, kb = jax.random.split(key)
    bound = 1.0 / math.sqrt(fan_in)
    w = jax.random.uniform(kw, (fan_in, fan_out), jnp.float32, -bound, bound)
    b = jax.random.uniform(kb, (fan_out,), jnp.float32, -bound, bound)
    return w, b


def init_gconv(key, fan_in, fan_out):
    kw, kb = jax.random.split(key)
    stdv = 1.0 / math.sqrt(fan_out)
    w = jax.random.uniform(kw, (fan_in, fan_out), jnp.float32, -stdv, stdv)
    b = jax.random.uniform(kb, (fan_out,), jnp.float32, -stdv, stdv)
    return w, b


def _padw(w, rows, cols):
    # Zero padding keeps padded units identically zero -> math unchanged.
    return jnp.pad(w, ((0, rows - w.shape[0]), (0, cols - w.shape[1])))


def _padb(b, cols):
    return jnp.pad(b, (0, cols - b.shape[0])).reshape(1, cols)


def init_params(key, view_dims, z_dim):
    zp = _ceil128(z_dim)
    params = {"encoders": [], "decoders": [], "z_dim": z_dim, "z_pad": zp,
              "view_dims": list(view_dims)}
    for d in view_dims:
        dp = _ceil128(d)
        key, *ks = jax.random.split(key, 11)
        # encoder (weights bf16 for the MXU; biases stay f32)
        w1, b1 = init_linear(ks[0], d, 500)
        w2, b2 = init_linear(ks[1], 500, 500)
        w3, b3 = init_linear(ks[2], 500, 2000)
        wgc, bgc = init_gconv(ks[3], 2000, z_dim)
        wmu, bmu = init_linear(ks[4], z_dim, z_dim)
        wlv, blv = init_linear(ks[5], z_dim, z_dim)
        enc = {
            "w1": _padw(w1, dp, 512).astype(jnp.bfloat16), "b1": _padb(b1, 512),
            "w2": _padw(w2, 512, 512).astype(jnp.bfloat16), "b2": _padb(b2, 512),
            "w3": _padw(w3, 512, 2048).astype(jnp.bfloat16), "b3": _padb(b3, 2048),
            "wgc": _padw(wgc, 2048, zp).astype(jnp.bfloat16), "bgc": _padb(bgc, zp),
            "wmu": _padw(wmu, zp, zp).astype(jnp.bfloat16), "bmu": _padb(bmu, zp),
            "wlv": _padw(wlv, zp, zp).astype(jnp.bfloat16), "blv": _padb(blv, zp),
        }
        # decoder
        dw1, db1 = init_linear(ks[6], z_dim, 2000)
        dw2, db2 = init_linear(ks[7], 2000, 500)
        dw3, db3 = init_linear(ks[8], 500, 500)
        dw4, db4 = init_linear(ks[9], 500, d)
        dec = {
            "w1": _padw(dw1, zp, 2048).astype(jnp.bfloat16), "b1": _padb(db1, 2048),
            "w2": _padw(dw2, 2048, 512).astype(jnp.bfloat16), "b2": _padb(db2, 512),
            "w3": _padw(dw3, 512, 512).astype(jnp.bfloat16), "b3": _padb(db3, 512),
            "w4": _padw(dw4, 512, dp).astype(jnp.bfloat16), "b4": _padb(db4, dp),
        }
        params["encoders"].append(enc)
        params["decoders"].append(dec)
    return params


# --------------------------------------------------------------------------
# Model forward (DVIMC.forward)
# --------------------------------------------------------------------------
def dvimc_forward(x_list, params, key, n_neighbors=5):
    cfg = _chip_config()
    z_dim = params["z_dim"]
    zpad = params["z_pad"]
    n = x_list[0].shape[0]
    v = len(x_list)

    # Pad each view's feature dim to a multiple of 128 (zeros: cosine sims,
    # encoder matmuls unchanged since w1 padded rows are zero).
    xp_list = [jnp.pad(x, ((0, 0), (0, _ceil128(x.shape[1]) - x.shape[1])))
               for x in x_list]

    # per-view kNN graph Laplacians
    adj_list, lap_list = [], []
    for xp in xp_list:
        adj, lap = compute_laplacian(xp, n_neighbors, cfg)
        adj_list.append(adj)
        lap_list.append(lap)
    adj_tensor = jnp.stack(adj_list)

    # inference_z (fused encoder per view), padded-latent outputs
    mu_list, var_list = [], []
    for xp, lap, p in zip(xp_list, lap_list, params["encoders"]):
        mu, var = encode_view(xp, lap, p, cfg)
        mu_list.append(mu)
        var_list.append(var)
    stack_mu_p = jnp.stack(mu_list)          # (v, n, zpad)
    stack_var_p = jnp.stack(var_list)

    # reparameterized sampling (all views) + mean over views, one tiled kernel
    eps = jax.random.normal(key, (v, n, z_dim), jnp.float32)
    eps = jnp.pad(eps, ((0, 0), (0, 0), (0, zpad - z_dim)))
    z_samples_p, z_mean_p = sample_and_mean(stack_mu_p, stack_var_p, eps, cfg)

    # generation_x (fused decoder per view); decoder w1 padded rows are zero,
    # so padded latent lanes cannot leak into the reconstruction.
    xr_list = []
    for vi, p in enumerate(params["decoders"]):
        xr_p = decode_view(z_samples_p[vi], p, cfg)
        xr_list.append(xr_p[:, :x_list[vi].shape[1]])

    # slice padded latents back to the true z_dim for all returned tensors
    z_mus = [m[:, :z_dim] for m in mu_list]
    z_vars = [s[:, :z_dim] for s in var_list]
    stack_mu = stack_mu_p[..., :z_dim]
    stack_var = stack_var_p[..., :z_dim]
    z_samples = [z_samples_p[vi, :, :z_dim] for vi in range(v)]
    z_sample_mean = z_mean_p[:, :z_dim]

    return (z_sample_mean, z_samples, adj_tensor, z_mus, z_vars,
            stack_mu, stack_var, xr_list)


# --------------------------------------------------------------------------
if __name__ == "__main__":
    key = jax.random.PRNGKey(0)
    k_data, k_param, k_sample = jax.random.split(key, 3)

    batch_n = 8
    z_dim = 8
    view_dims = [16, 20]          # args.multiview_dims
    n_neighbors = 5               # args.k

    x_list = []
    for d in view_dims:
        k_data, sub = jax.random.split(k_data)
        x_list.append(jax.random.normal(sub, (batch_n, d), jnp.float32))

    params = init_params(k_param, view_dims, z_dim)

    out = dvimc_forward(x_list, params, k_sample, n_neighbors=n_neighbors)
    jax.block_until_ready(out)

    (z_mean, z_samples, adj_tensor, z_mus, z_vars,
     stack_mu, stack_var, xr_list) = out
    assert z_mean.shape == (batch_n, z_dim)
    assert adj_tensor.shape == (len(view_dims), batch_n, batch_n)
    assert stack_mu.shape == (len(view_dims), batch_n, z_dim)
    assert z_samples[0].shape == (batch_n, z_dim)
    assert xr_list[0].shape == (batch_n, view_dims[0])
    assert xr_list[1].shape == (batch_n, view_dims[1])
    assert bool(jnp.all(jnp.isfinite(z_mean)))
    assert bool(jnp.all(jnp.isfinite(xr_list[0])))
    assert bool(jnp.all(jnp.isfinite(xr_list[1])))
    print("KERNEL_OK")
</pallas_src>

<mosaic_0001>
module attributes {stable_mosaic.version = 11 : i64} {
  func.func @_cosine_kernel(%arg0: i32, %arg1: i32, %arg2: memref<8x128xf32, #tpu.memory_space<vmem>>, %arg3: memref<8x128xf32, #tpu.memory_space<vmem>>, %arg4: memref<8x8xf32, #tpu.memory_space<vmem>>) attributes {dimension_semantics = [#tpu.dimension_semantics<parallel>, #tpu.dimension_semantics<parallel>], iteration_bounds = array<i64: 1, 1>, scalar_prefetch = 0 : i64, scratch_operands = 0 : i64, tpu.core_type = #tpu.core_type<tc>, window_params = [{transform_indices = @transform_0, window_bounds = array<i64: 8, 128>}, {transform_indices = @transform_1, window_bounds = array<i64: 8, 128>}, {transform_indices = @transform_2, window_bounds = array<i64: 8, 8>}]} {
    %c0 = arith.constant 0 : index
    %c0_0 = arith.constant 0 : index
    %0 = vector.load %arg2[%c0, %c0_0] : memref<8x128xf32, #tpu.memory_space<vmem>>, vector<8x128xf32>
    %c0_1 = arith.constant 0 : index
    %c0_2 = arith.constant 0 : index
    %1 = vector.load %arg3[%c0_1, %c0_2] : memref<8x128xf32, #tpu.memory_space<vmem>>, vector<8x128xf32>
    %cst = arith.constant dense<0.000000e+00> : vector<8x8xf32>
    %2 = tpu.matmul %0, %1, %cst {dimension_numbers = #tpu.dot_dimension_numbers<[1], [1], [0], [0], [0, 0, 1, 0], [], []>} : vector<8x128xf32>, vector<8x128xf32>, vector<8x8xf32> -> vector<8x8xf32>
    %c0_3 = arith.constant 0 : index
    %c0_4 = arith.constant 0 : index
    %3 = vector.load %arg4[%c0_3, %c0_4] : memref<8x8xf32, #tpu.memory_space<vmem>>, vector<8x8xf32>
    tpu.vector_store %arg4[%c0_3, %c0_4], %2 {strides = array<i32>} : memref<8x8xf32, #tpu.memory_space<vmem>>, vector<8x8xf32>,
    return
  }
  func.func @transform_0(%arg0: i32, %arg1: i32) -> (i32, i32) {
    %c0_i32 = arith.constant 0 : i32
    %c0_i32_0 = arith.constant 0 : i32
    return %arg0, %c0_i32 : i32, i32
  }
  func.func @transform_1(%arg0: i32, %arg1: i32) -> (i32, i32) {
    %c0_i32 = arith.constant 0 : i32
    %c0_i32_0 = arith.constant 0 : i32
    return %arg1, %c0_i32 : i32, i32
  }
  func.func @transform_2(%arg0: i32, %arg1: i32) -> (i32, i32) {
    %c0_i32 = arith.constant 0 : i32
    return %arg0, %arg1 : i32, i32
  }
}

</mosaic_0001>

<llo_original>
// kernel: tpu_custom_call.1
$region0: #{tpu_custom_call.1}
  #allocation0 [shape = 'u32[]', space=smem, size = 0x4, offset = 0x4, fixed_abs, tag = 'smem constant byte address 0x4 - core index']
  #allocation1 [shape = 'u32[72,128]{1,0:T(1,128)}', space=vmem, size = 0x9000, scoped, tag = 'internal scratch']
  %s0 = inlined_call_operand.hbm [shape: f32[8,128], index: 0, kind: input, shape index: {}]
  %s1 = inlined_call_operand.hbm [shape: f32[8,128], index: 1, kind: input, shape index: {}]
  %s2 = inlined_call_operand.hbm [shape: f32[8,8], index: 2, kind: output, shape index: {}]
  %s3 = sld [smem:[#allocation0]]
  $region26: #{tpu_custom_call.1} parent=0
    _
  %s5 = ssub.s32 1, %s3
  %s6 = scalar_select 0, %s5, %s3
  $region1: #{tpu_custom_call.1} parent=0
    #allocation2 [shape = 'u8[4096]{0}', space=vmem, size = 0x1000, scoped, tag = 'input window, operand 0, single buffered']
    #allocation3 [shape = 's32[1]{0}', space=sflag, size = 0x4, scoped, tag = 'scoped memory for tpu_custom_call.1']
    #allocation4 [shape = 's32[1]{0}', space=sflag, size = 0x4, scoped, tag = 'scoped memory for tpu_custom_call.1']
    #allocation5 [shape = 'u8[4096]{0}', space=vmem, size = 0x1000, scoped, tag = 'input window, operand 1, single buffered']
    #allocation6 [shape = 's32[1]{0}', space=sflag, size = 0x4, scoped, tag = 'scoped memory for tpu_custom_call.1']
    #allocation7 [shape = 'u8[4096]{0}', space=vmem, size = 0x1000, scoped, tag = 'output window, operand 0, single buffered']
    %7 = vsyncpa [#allocation3], 0
    %8 = vsyncpa [#allocation6], 0
    %9 = vsyncpa [#allocation4], 0
    // Predicated region
    $region2: #{tpu_custom_call.1} parent=1 // pred_check
      _
    $region3: #{tpu_custom_call.1} parent=1 // pred_check_branch
      %11 = sbr.rel (0) target = $region5
    $region4: #{tpu_custom_call.1} parent=1 // pred_region
      %13 = vsyncadd [#allocation3], 0
      %s15 = sshll.u32 %s0, 4
      %s16 = int_to_ptr.hbm [resolvable:$true] %s15
      %s17 = sshll.u32 [#allocation2], 4
      %s18 = int_to_ptr.vmem [resolvable:$true] %s17
      %20 = dma.hbm_to_vmem [thread:$0]  %s16, 128, %s18, [#allocation3]
    $region5: #{tpu_custom_call.1} parent=1 // pred_fallthru
      _
    // Predicated region
    $region6: #{tpu_custom_call.1} parent=1 // pred_check
      _
    $region7: #{tpu_custom_call.1} parent=1 // pred_check_branch
      %22 = sbr.rel (0) target = $region9
    $region8: #{tpu_custom_call.1} parent=1 // pred_region
      %24 = vsyncadd [#allocation6], 0
      %s26 = sshll.u32 %s1, 4
      %s27 = int_to_ptr.hbm [resolvable:$true] %s26
      %s28 = sshll.u32 [#allocation5], 4
      %s29 = int_to_ptr.vmem [resolvable:$true] %s28
      %31 = dma.hbm_to_vmem [thread:$0]  %s27, 128, %s29, [#allocation6]
    $region9: #{tpu_custom_call.1} parent=1 // pred_fallthru
      _
    // Predicated region
    $region10: #{tpu_custom_call.1} parent=1 // pred_check
      _
    $region11: #{tpu_custom_call.1} parent=1 // pred_check_branch
      %33 = sbr.rel (0) target = $region13
    $region12: #{tpu_custom_call.1} parent=1 // pred_region
      %35 = dma.done [#allocation3], 128
    $region13: #{tpu_custom_call.1} parent=1 // pred_fallthru
      _
    // Predicated region
    $region14: #{tpu_custom_call.1} parent=1 // pred_check
      _
    $region15: #{tpu_custom_call.1} parent=1 // pred_check_branch
      %37 = sbr.rel (0) target = $region17
    $region16: #{tpu_custom_call.1} parent=1 // pred_region
      %39 = dma.done [#allocation6], 128
    $region17: #{tpu_custom_call.1} parent=1 // pred_fallthru
      _
    %v40 = vld [vmem:[#allocation2] sm:$0xff]
    %v41 = vld [vmem:[#allocation5] sm:$0xff]
    %42 = vmatpush.xpose.msra.mxu0 0.0
    %43 = vmatpush.xpose.msra.mxu0 0.0
    %44 = vmatpush.xpose.msra.mxu0 0.0
    %45 = vmatpush.xpose.msra.mxu0 0.0
    %46 = vmatpush.xpose.msra.mxu0 0.0
    %47 = vmatpush.xpose.msra.mxu0 0.0
    %48 = vmatpush.xpose.msra.mxu0 0.0
    %49 = vmatpush.xpose.msra.mxu0 0.0
    %50 = vmatpush.xpose.msra.mxu0 0.0
    %51 = vmatpush.xpose.msra.mxu0 0.0
    %52 = vmatpush.xpose.msra.mxu0 0.0
    %53 = vmatpush.xpose.msra.mxu0 0.0
    %54 = vmatpush.xpose.msra.mxu0 0.0
    %55 = vmatpush.xpose.msra.mxu0 0.0
    %56 = vmatpush.xpose.msra.mxu0 0.0
    %57 = vmatpush.xpose.msra.mxu0 %v41
    %58 = vmatmul.f32.gmra.mxu0 %v40
    %v59 = vpop.f32.mrf.mxu0
    %v60 = vadd.f32 0.0, %v59
    %61 = vdwg.mxu0
    %vm62 = vcmask 64512
    %63 = vst.msk [vmem:[#allocation7] sm:$0xff] %vm62, %v60
    // Predicated region
    $region18: #{tpu_custom_call.1} parent=1 // pred_check
      _
    $region19: #{tpu_custom_call.1} parent=1 // pred_check_branch
      %65 = sbr.rel (0) target = $region21
    $region20: #{tpu_custom_call.1} parent=1 // pred_region
      %67 = vsyncadd [#allocation4], 0
      %s69 = sshll.u32 [#allocation7], 4
      %s70 = int_to_ptr.vmem [resolvable:$true] %s69
      %s71 = sshll.u32 %s2, 4
      %s72 = int_to_ptr.hbm [resolvable:$true] %s71
      %74 = dma.vmem_to_hbm [thread:$0]  %s70, 128, %s72, [#allocation4]
    $region21: #{tpu_custom_call.1} parent=1 // pred_fallthru
      _
    // Predicated region
    $region22: #{tpu_custom_call.1} parent=1 // pred_check
      _
    $region23: #{tpu_custom_call.1} parent=1 // pred_check_branch
      %76 = sbr.rel (0) target = $region25
    $region24: #{tpu_custom_call.1} parent=1 // pred_region
      %78 = dma.done [#allocation4], 128
    $region25: #{tpu_custom_call.1} parent=1 // pred_fallthru
      _
    %79 = vsyncpa [#allocation3], 1
    %80 = vsyncpa [#allocation6], 1
    %81 = vsyncpa [#allocation4], 1

</llo_original>
